<compile_context>
chip_gen: v6e
topology: v6e:2x2x1
jax: 0.10.0
libtpu: 0.0.40
codegen_flags: <defaults>
</compile_context>

<pallas_src>
import math

import jax
import jax.numpy as jnp
from jax.experimental import pallas as pl
from jax.experimental.pallas import tpu as pltpu


def _round_up(x: int, m: int) -> int:
    return -(-x // m) * m


def _pe_kernel(dp_ref, o_ref):
    """Write one (tile_rows, L) lane-dense slab of the folded PE table.

    dp_ref: (2, L) f32.
      row 0: scale[c]  = k * freq[c]
      row 1: offset[c] = fold[c] * freq[c] + phase[c]   (phase = pi/2 on cos lanes)
    angle(r, c) = (base + r) * scale[c] + offset[c] = position * freq + phase,
    and cos(x) = sin(x + pi/2), so a single sin covers both lane kinds.
    """
    tile_rows, _ = o_ref.shape
    dp = dp_ref[...]                                    # (2, L)
    scale = dp[0:1, :]                                  # (1, L)
    base = (pl.program_id(0) * tile_rows).astype(jnp.float32)
    offset = dp[1:2, :] + base * scale                  # (1, L), once per tile
    row = jax.lax.broadcasted_iota(jnp.int32, o_ref.shape, 0).astype(jnp.float32)
    o_ref[...] = jnp.sin(row * scale + offset).astype(o_ref.dtype)


def _choose_tile_rows(R: int, L: int, itemsize: int, max_tile_bytes: int) -> int:
    """Pick tile_rows: multiple of the sublane granularity, tile <= budget,
    grid >= 2 steps (v7x TC split) with a bias toward even grid counts.
    Never degenerates to tiny tiles; ragged last block is left for Pallas to
    mask (no pad+slice)."""
    gran = 8 if itemsize >= 4 else (16 if itemsize == 2 else 32)
    if R <= gran:
        return R                      # single full-array block; nothing to split
    row_bytes = itemsize * L
    budget_rows = max(gran, (max_tile_bytes // row_bytes) // gran * gran)

    # Smallest even grid split whose tile fits the byte budget.
    g = 2
    while _round_up(-(-R // g), gran) > budget_rows:
        g += 2
    tile = _round_up(-(-R // g), gran)

    # Prefer a nearby exact divisor with an even grid (no ragged tail), but
    # only a non-degenerate one: >= max(tile // 2, 128) rows (capped at tile).
    floor_t = max(gran, tile // 2, min(tile, 128))
    for t in range(tile, floor_t - 1, -gran):
        if R % t == 0 and (R // t) % 2 == 0:
            return t
    return tile


def make_positional_encoding(
    d_model: int,
    max_len: int = 5000,
    dtype=jnp.float32,
    max_tile_bytes: int = 2 * 1024 * 1024,
):
    """Build the (1, max_len, d_model) PE table with a Pallas kernel."""
    assert d_model % 2 == 0, "PositionalEncoding requires even d_model (as in PyTorch)"
    itemsize = jnp.dtype(dtype).itemsize

    # Lane folding: present a last dim that is a multiple of 128 lanes
    # whenever d_model is not already one (k consecutive positions per row).
    k = 1 if d_model % 128 == 0 else (128 // math.gcd(d_model, 128))
    L = k * d_model
    R = -(-max_len // k)                       # folded rows (ceil)
    tile_rows = _choose_tile_rows(R, L, itemsize, max_tile_bytes)
    grid = pl.cdiv(R, tile_rows)               # ragged last block masked by Pallas

    # Host-side precompute of the tiny (2, L) per-column scale/offset rows.
    j = jnp.arange(d_model)
    freq = jnp.exp(
        (2 * (j // 2)).astype(jnp.float32)
        * jnp.float32(-math.log(10000.0) / d_model)
    )
    phase = jnp.where((j % 2) == 1, jnp.float32(math.pi / 2.0), jnp.float32(0.0))
    freq_L = jnp.tile(freq, k)                                     # (L,)
    fold = jnp.repeat(jnp.arange(k, dtype=jnp.float32), d_model)   # (L,) = c // d_model
    scale_row = jnp.float32(k) * freq_L
    offset_row = fold * freq_L + jnp.tile(phase, k)
    dp = jnp.stack([scale_row, offset_row], axis=0)                # (2, L) f32

    pe_folded = pl.pallas_call(
        _pe_kernel,
        out_shape=jax.ShapeDtypeStruct((R, L), dtype),
        grid_spec=pltpu.PrefetchScalarGridSpec(
            num_scalar_prefetch=0,
            grid=(grid,),
            in_specs=[pl.BlockSpec((2, L), lambda i: (0, 0))],
            out_specs=pl.BlockSpec((tile_rows, L), lambda i: (i, 0)),
        ),
        compiler_params=pltpu.CompilerParams(dimension_semantics=("parallel",)),
    )(dp)

    # (R, k*d_model) -> (R*k, d_model) is a row-major (free) reshape.
    pe = pe_folded.reshape(R * k, d_model)
    if R * k != max_len:
        # Only when max_len % k != 0: fold remainder (< k positions); one-time
        # init-cost slice, the tile grid itself is exact.
        pe = pe[:max_len]
    return pe[None]  # (1, max_len, d_model)


class PositionalEncoding:
    """JAX/Pallas equivalent of the PyTorch PositionalEncoding module."""

    def __init__(self, d_model: int, max_len: int = 5000, dtype=jnp.float32):
        self.pe = make_positional_encoding(d_model, max_len, dtype=dtype)

    def __call__(self, x):
        # PyTorch forward ignores x and returns the full pe buffer.
        return self.pe


def _reference_pe(d_model: int, max_len: int):
    """Pure-JAX reference matching the PyTorch __init__ exactly."""
    position = jnp.arange(0, max_len, dtype=jnp.float32)[:, None]
    div_term = jnp.exp(
        jnp.arange(0, d_model, 2, dtype=jnp.float32) * (-math.log(10000.0) / d_model)
    )
    pe = jnp.zeros((max_len, d_model), dtype=jnp.float32)
    pe = pe.at[:, 0::2].set(jnp.sin(position * div_term))
    pe = pe.at[:, 1::2].set(jnp.cos(position * div_term))
    return pe[None]


if __name__ == "__main__":
    d_model = 32
    max_len = 128

    # Deterministic example input (ignored by forward, as in the PyTorch module).
    key = jax.random.PRNGKey(0)
    x = jax.random.normal(key, (2, 8, d_model), dtype=jnp.float32)

    module = PositionalEncoding(d_model, max_len=max_len)
    out = jax.block_until_ready(module(x))
    assert out.shape == (1, max_len, d_model), out.shape
    ref = _reference_pe(d_model, max_len)
    # cos(x)=sin(x+pi/2) in f32 costs O(1e-5) at these positions -> 1e-4 tol.
    assert jnp.allclose(out, ref, atol=1e-4, rtol=1e-4), "mismatch vs reference"

    # d_model > 128 and not a multiple of 128: lane folding (k=4, L=640),
    # even 2-step grid with a ragged (masked) last block.
    out2 = jax.block_until_ready(make_positional_encoding(160, max_len=200))
    ref2 = _reference_pe(160, 200)
    assert out2.shape == (1, 200, 160), out2.shape
    assert jnp.allclose(out2, ref2, atol=1e-4, rtol=1e-4), "mismatch (d_model=160)"

    # Tiny tile budget: multi-step grid + ragged final block, no pad/slice.
    out3 = jax.block_until_ready(
        make_positional_encoding(32, max_len=200, max_tile_bytes=8 * 128 * 4)
    )
    ref3 = _reference_pe(32, 200)
    assert out3.shape == (1, 200, 32), out3.shape
    assert jnp.allclose(out3, ref3, atol=1e-4, rtol=1e-4), "mismatch (small tiles)"

    # bf16 storage path: f32 math in-kernel, narrowed only on the final store.
    out4 = jax.block_until_ready(
        make_positional_encoding(64, max_len=96, dtype=jnp.bfloat16)
    )
    ref4 = _reference_pe(64, 96)
    assert out4.dtype == jnp.bfloat16
    assert jnp.allclose(out4.astype(jnp.float32), ref4, atol=1e-2, rtol=1e-2), (
        "mismatch (bf16)"
    )

    print("KERNEL_OK")
</pallas_src>

<mosaic_0001>
module attributes {stable_mosaic.version = 11 : i64} {
  func.func @_pe_kernel(%arg0: i32, %arg1: memref<2x128xf32, #tpu.memory_space<vmem>>, %arg2: memref<16x128xf32, #tpu.memory_space<vmem>>) attributes {dimension_semantics = [#tpu.dimension_semantics<parallel>], iteration_bounds = array<i64: 2>, scalar_prefetch = 0 : i64, scratch_operands = 0 : i64, tpu.core_type = #tpu.core_type<tc>, window_params = [{pipeline_mode = #tpu.pipeline_mode<synchronous>, transform_indices = @transform_0, window_bounds = array<i64: 2, 128>}, {transform_indices = @transform_1, window_bounds = array<i64: 16, 128>}]} {
    %c0 = arith.constant 0 : index
    %c0_0 = arith.constant 0 : index
    %0 = vector.load %arg1[%c0, %c0_0] : memref<2x128xf32, #tpu.memory_space<vmem>>, vector<2x128xf32>
    %1 = vector.extract_strided_slice %0 {offsets = [0, 0], sizes = [1, 128], strides = [1, 1]} : vector<2x128xf32> to vector<1x128xf32>
    %c16_i32 = arith.constant 16 : i32
    %2 = arith.muli %arg0, %c16_i32 : i32
    %3 = arith.sitofp %2 : i32 to f32
    %4 = vector.extract_strided_slice %0 {offsets = [1, 0], sizes = [1, 128], strides = [1, 1]} : vector<2x128xf32> to vector<1x128xf32>
    %5 = vector.broadcast %3 : f32 to vector<1x128xf32>
    %6 = arith.mulf %5, %1 : vector<1x128xf32>
    %7 = arith.addf %4, %6 : vector<1x128xf32>
    %8 = tpu.iota {dimensions = array<i32: 0>} : vector<16x128xi32>
    %9 = arith.sitofp %8 : vector<16x128xi32> to vector<16x128xf32>
    %10 = vector.broadcast %1 : vector<1x128xf32> to vector<16x128xf32>
    %11 = arith.mulf %9, %10 : vector<16x128xf32>
    %12 = vector.broadcast %7 : vector<1x128xf32> to vector<16x128xf32>
    %13 = arith.addf %11, %12 : vector<16x128xf32>
    %14 = math.sin %13 : vector<16x128xf32>
    %c0_1 = arith.constant 0 : index
    %c0_2 = arith.constant 0 : index
    %15 = vector.load %arg2[%c0_1, %c0_2] : memref<16x128xf32, #tpu.memory_space<vmem>>, vector<16x128xf32>
    tpu.vector_store %arg2[%c0_1, %c0_2], %14 {strides = array<i32>} : memref<16x128xf32, #tpu.memory_space<vmem>>, vector<16x128xf32>,
    return
  }
  func.func @transform_0(%arg0: i32) -> (i32, i32) {
    %c0_i32 = arith.constant 0 : i32
    %c0_i32_0 = arith.constant 0 : i32
    %c0_i32_1 = arith.constant 0 : i32
    return %c0_i32, %c0_i32_0 : i32, i32
  }
  func.func @transform_1(%arg0: i32) -> (i32, i32) {
    %c0_i32 = arith.constant 0 : i32
    %c0_i32_0 = arith.constant 0 : i32
    return %arg0, %c0_i32 : i32, i32
  }
}

</mosaic_0001>

<llo_original>
// kernel: tpu_custom_call.1
$region0: #{tpu_custom_call.1}
  #allocation0 [shape = 'u32[]', space=smem, size = 0x4, offset = 0x4, fixed_abs, tag = 'smem constant byte address 0x4 - core index']
  #allocation1 [shape = 'u32[144,128]{1,0:T(1,128)}', space=vmem, size = 0x12000, scoped, tag = 'internal scratch']
  %s0 = inlined_call_operand.hbm [shape: f32[2,128], index: 0, kind: input, shape index: {}]
  %s1 = inlined_call_operand.hbm [shape: f32[32,128], index: 1, kind: output, shape index: {}]
  %s2 = sld [smem:[#allocation0]]
  $region41: #{tpu_custom_call.1} parent=0
    _
  %s4 = ssub.s32 1, %s2
  %s5 = scalar_select 0, %s4, %s2
  $region1: #{tpu_custom_call.1} parent=0
    #allocation2 [shape = 'u8[1024]{0}', space=vmem, size = 0x400, scoped, tag = 'input window, operand 0, single buffered']
    #allocation3 [shape = 's32[2]{0}', space=sflag, size = 0x8, scoped, tag = 'scoped memory for tpu_custom_call.1']
    #allocation4 [shape = 's32[2]{0}', space=sflag, size = 0x8, scoped, tag = 'scoped memory for tpu_custom_call.1']
    #allocation5 [shape = 'u8[16384]{0}', space=vmem, size = 0x4000, scoped, tag = 'output window, operand 0']
    %6 = vsyncpa [#allocation3], 0
    %7 = vsyncpa [#allocation4], 0
    %s8 = scalar_lea.sflag [#allocation4], 1
    %9 = vsyncpa %s8, 0
    loop: start=0, step=1, limit=4
    $region2: #{tpu_custom_call.1} parent=1 // loop_pre_header
      _
    $region3: #{tpu_custom_call.1} parent=1 // loop_header
      %s11 = sphi 0, %s15
      %p12 = scmp.ge.s32.totalorder %s11, 4
      %s19 = sphi 0, %s19
      %s21 = sphi 0, %s19
      %s22 = sphi 0, %s21
      %s36 = sphi 0, %s22
      %s42 = sphi 0, %s44
      %s45 = sphi 0, %s42
      %s46 = sphi 0, %s45
      %s62 = sphi 0, %s46
    $region4: #{tpu_custom_call.1} parent=1 // loop_header_branch
      %14 = sbr.rel (%p12) target = $region8
    $region5: #{tpu_custom_call.1} parent=1 // loop_body
      %s16 = ssub.s32 %s11, 1
      %s17 = ssub.s32 %s11, 2
      %s18 = sadd.s32 %s11, 1
      %s20 = sadd.s32 %s19, 1
      %p23 = scmp.eq.s32.totalorder %s11, 1
      %p24 = scmp.ne.s32.totalorder %s19, %s21
      %p25 = scmp.eq.s32.totalorder %s11, 0
      %p26 = por %p24, %p25
      %p27 = scmp.ne.s32.totalorder %s19, %s21
      %p28 = scmp.eq.s32.totalorder %s16, 1
      %p29 = por %p27, %p28
      %p30 = scmp.ne.s32.totalorder %s21, %s22
      %p31 = scmp.eq.s32.totalorder %s16, 0
      %p32 = por %p30, %p31
      %p33 = scmp.ne.s32.totalorder %s21, %s22
      %p34 = scmp.eq.s32.totalorder %s17, 1
      %p35 = por %p33, %p34
      %p37 = scmp.ne.s32.totalorder %s22, %s36
      %p38 = scmp.eq.s32.totalorder %s17, 0
      %p39 = por %p37, %p38
      %s40 = ssub.s32 %s11, %s18
      %p41 = scmp.eq.s32.totalorder %s40, 0
      %s43 = sadd.s32 %s42, 1
      %s44 = scalar_select %p41, %s42, %s43
      %p47 = pneg %p41
      %p48 = scmp.eq.s32.totalorder %s11, 1
      %p49 = por %p47, %p48
      %p50 = scmp.ne.s32.totalorder %s42, %s45
      %p51 = scmp.eq.s32.totalorder %s11, 0
      %p52 = por %p50, %p51
      %p53 = scmp.ne.s32.totalorder %s42, %s45
      %p54 = scmp.eq.s32.totalorder %s16, 1
      %p55 = por %p53, %p54
      %p56 = scmp.ne.s32.totalorder %s45, %s46
      %p57 = scmp.eq.s32.totalorder %s16, 0
      %p58 = por %p56, %p57
      %p59 = scmp.ne.s32.totalorder %s45, %s46
      %p60 = scmp.eq.s32.totalorder %s17, 1
      %p61 = por %p59, %p60
      %p63 = scmp.ne.s32.totalorder %s46, %s62
      %p64 = scmp.eq.s32.totalorder %s17, 0
      %p65 = por %p63, %p64
      %p66 = scmp.le.s32.totalorder 1, %s11
      %p67 = scmp.lt.s32.totalorder %s11, 3
      %p68 = pnand %p66, %p67
      %p69 = pneg %p68
      // Predicated region
      $region9: #{tpu_custom_call.1} parent=5 // pred_check
        _
      $region10: #{tpu_custom_call.1} parent=5 // pred_check_branch
        %71 = sbr.rel (%p68) target = $region12
      $region11: #{tpu_custom_call.1} parent=5 // pred_region
        %s72 = ssub.s32 %s11, 1
        // Predicated region
        $region13: #{tpu_custom_call.1} parent=11 // pred_check
          %p73 = pneg %p32
        $region14: #{tpu_custom_call.1} parent=11 // pred_check_branch
          %75 = sbr.rel (%p73) target = $region16
        $region15: #{tpu_custom_call.1} parent=11 // pred_region
          %s77 = ssub.s32 32, 32
          %78 = vsyncadd [#allocation3], %s77
          %s80 = sshll.u32 [#allocation2], 4
          %s81 = int_to_ptr.vmem [resolvable:$true] %s80
          %83 = dma.hbm_to_vmem [thread:$0]  %s0, 32, %s81, [#allocation3]
        $region16: #{tpu_custom_call.1} parent=11 // pred_fallthru
          _
      $region12: #{tpu_custom_call.1} parent=5 // pred_fallthru
        _
      %p84 = scmp.lt.s32.totalorder %s11, 2
      // Predicated region
      $region17: #{tpu_custom_call.1} parent=5 // pred_check
        %p85 = pneg %p84
      $region18: #{tpu_custom_call.1} parent=5 // pred_check_branch
        %87 = sbr.rel (%p85) target = $region20
      $region19: #{tpu_custom_call.1} parent=5 // pred_region
        _
      $region20: #{tpu_custom_call.1} parent=5 // pred_fallthru
        _
      %p88 = scmp.le.s32.totalorder 1, %s11
      %p89 = scmp.lt.s32.totalorder %s11, 3
      %p90 = pnand %p88, %p89
      %p91 = pneg %p90
      // Predicated region
      $region21: #{tpu_custom_call.1} parent=5 // pred_check
        _
      $region22: #{tpu_custom_call.1} parent=5 // pred_check_branch
        %93 = sbr.rel (%p90) target = $region24
      $region23: #{tpu_custom_call.1} parent=5 // pred_region
        %s94 = ssub.s32 %s11, 1
        // Predicated region
        $region25: #{tpu_custom_call.1} parent=23 // pred_check
          %p95 = pneg %p32
        $region26: #{tpu_custom_call.1} parent=23 // pred_check_branch
          %97 = sbr.rel (%p95) target = $region28
        $region27: #{tpu_custom_call.1} parent=23 // pred_region
          %98 = dma.done [#allocation3], 32
        $region28: #{tpu_custom_call.1} parent=23 // pred_fallthru
          _
        %p99 = pneg %p32
        %p100 = pneg %p29
        %p101 = pneg %p58
        %p102 = pneg %p55
        %s103 = sand.u32 %s45, 1
        %s104 = scalar_lea.sflag [#allocation4], %s103
        %s105 = sand.u32 %s45, 1
        %s106 = smul.addr %s105, 16
        %s107 = scalar_lea.vmem [#allocation5], %s106
        %s108 = smul.u32 2, %s16
        %v109 = vld [vmem:[#allocation2] sm:$0x3]
        %s110 = smul.u32 %s16, 16
        %s111 = scvt.s32.f32 %s110
        %v112 = vstv %s111
        %v113 = vmul.f32 %v112, %v109
        %v115 = vrot.slane %v113, 7
        %v117 = vadd.f32 %v109, %v115
        %v118 = vlaneseq
        %v119 = vshrl.u32 %v118, 7
        %v120 = vadd.s32 %v119, 8
        %v121 = vcvt.s32.f32 %v119
        %v122 = vcvt.s32.f32 %v120
        %v123 = vlaneseq
        %v124 = vshrl.u32 %v123, 7
        %v125 = vsub.s32 0, %v124
        %v126 = vrot.slane %v109, %v125
        %v127 = vmul.f32 %v121, %v126
        %v128 = vmul.f32 %v122, %v126
        %v129 = vlaneseq
        %v130 = vshrl.u32 %v129, 7
        %v131 = vsub.s32 1, %v130
        %v132 = vrot.slane %v117, %v131
        %v133 = vadd.f32 %v127, %v132
        %v134 = vadd.f32 %v128, %v132
        %v135 = vand.u32 2147483647, %v133
        %vm136 = vcmp.le.f32.partialorder %v135, 0.7853982
        %vm137 = vcmp.lt.s32.totalorder %v133, 0
        %v138 = vand.u32 %v133, 2139095040
        %v139 = vshrl.u32 %v138, 23
        %v140 = vsub.s32 %v139, 127
        %v141 = vand.u32 2147483647, %v133
        %v142 = vand.u32 %v141, 8388607
        %v143 = vor.u32 %v142, 8388608
        %v144 = vsub.s32 0, %v143
        %v145 = vadd.s32 %v140, 1
        %vm146 = vcmp.gt.s32.totalorder %v145, 0
        %v147 = vsel %vm146, %v145, 0
        %v148 = vshrl.u32 %v147, 5
        %v149 = vand.u32 %v147, 31
        %v150 = vsub.s32 32, %v149
        %v151 = vshrl.u32 683565275, %v150
        %v152 = vshll.u32 683565275, %v149
        %v153 = vshrl.u32 2475754826, %v150
        %v154 = vor.u32 %v152, %v153
        %v155 = vshll.u32 2475754826, %v149
        %v156 = vshrl.u32 2131351028, %v150
        %v157 = vor.u32 %v155, %v156
        %v158 = vshll.u32 2131351028, %v149
        %v159 = vshrl.u32 2102212464, %v150
        %v160 = vor.u32 %v158, %v159
        %v161 = vshll.u32 2102212464, %v149
        %v162 = vshrl.u32 920167782, %v150
        %v163 = vor.u32 %v161, %v162
        %v164 = vshll.u32 920167782, %v149
        %v165 = vshrl.u32 1326507024, %v150
        %v166 = vor.u32 %v164, %v165
        %vm167 = vcmp.lt.s32.totalorder %v148, 1
        %vm168 = vcmp.lt.s32.totalorder %v148, 2
        %vm169 = vcmp.lt.s32.totalorder %v148, 3
        %vm170 = vcmp.lt.s32.totalorder %v148, 4
        %v171 = vsel %vm167, %v151, %v154
        %v172 = vsel %vm170, %v160, 2102212464
        %v173 = vsel %vm169, %v157, %v172
        %v174 = vsel %vm168, %v171, %v173
        %v175 = vsel %vm167, %v154, %v157
        %v176 = vsel %vm170, %v163, 920167782
        %v177 = vsel %vm169, %v160, %v176
        %v178 = vsel %vm168, %v175, %v177
        %v179 = vsel %vm167, %v157, %v160
        %v180 = vsel %vm170, %v166, 1326507024
        %v181 = vsel %vm169, %v163, %v180
        %v182 = vsel %vm168, %v179, %v181
        %v183 = vshll.u32 %v143, 8
        %v184 = vmul.u32.u64.compose %v183, %v182
        %v185 = vextract.low.u32 %v184
        %v186 = vextract.high.u32 %v184
        %v187 = vmul.u32.u64.compose %v183, %v178
        %v188 = vextract.low.u32 %v187
        %v189 = vextract.high.u32 %v187
        %v190 = vmul.u32 %v183, %v174
        %v191 = vadd.s32 %v186, %v188
        %vm192 = vc.u32 %v186, %v188
        %v193 = vadd.s32 %v189, 1
        %v194 = vsel %vm192, %v193, %v189
        %v195 = vadd.s32 %v190, %v194
        %v196 = vadd.s32 %v195, 536870912
        %v197 = vshrl.u32 %v196, 30
        %v198 = vshll.u32 %v197, 30
        %v199 = vsub.s32 %v195, %v198
        %vm200 = vcmp.lt.s32.totalorder %v199, 0
        %v201 = vsub.s32 0, %v199
        %v202 = vsel %vm200, %v201, %v199
        %v203 = vclz %v202
        %v204 = vsub.s32 %v203, 2
        %vm205 = vcmp.gt.s32.totalorder 0, %v204
        %v206 = vsel %vm205, 0, %v204
        %v207 = vsub.s32 32, %v206
        %v208 = vshll.u32 %v199, %v206
        %v209 = vshrl.u32 %v191, %v207
        %v210 = vor.u32 %v208, %v209
        %v211 = vsub.s32 4294967266, %v206
        %v212 = vadd.s32 %v211, 127
        %v213 = vshll.u32 %v212, 23
        %v214 = vor.u32 4788187, %v213
        %v215 = vand.u32 2147483647, %v214
        %v217 = vcvt.s32.f32 %v210
        %v218 = vmul.f32 %v217, %v215
        %v219 = vxor.u32 %v218, 2147483648
        %v220 = vsel %vm137, %v219, %v218
        %v221 = vsub.s32 4, %v197
        %v222 = vsel %vm137, %v221, %v197
        %v223 = vsel %vm136, %v133, %v220
        %v224 = vsel %vm136, 0, %v222
        %v225 = vcosq.f32.pop %v223
        %v226 = vsinq.f32.pop %v223
        %vm227 = vweird.f32 %v133
        %v228 = vadd.s32 %v224, 3
        %v229 = vand.u32 %v228, 3
        %vm230 = vcmp.lt.s32.totalorder %v229, 2
        %vm231 = vcmp.eq.s32.totalorder %v229, 0
        %v232 = vxor.u32 %v226, 2147483648
        %v233 = vsel %vm231, %v225, %v232
        %vm234 = vcmp.eq.s32.totalorder %v229, 2
        %v235 = vxor.u32 %v225, 2147483648
        %v236 = vsel %vm234, %v235, %v226
        %v237 = vsel %vm230, %v233, %v236
        %v238 = vsel %vm227, nan, %v237
        %v239 = vand.u32 2147483647, %v134
        %vm240 = vcmp.le.f32.partialorder %v239, 0.7853982
        %vm241 = vcmp.lt.s32.totalorder %v134, 0
        %v242 = vand.u32 %v134, 2139095040
        %v243 = vshrl.u32 %v242, 23
        %v244 = vsub.s32 %v243, 127
        %v245 = vand.u32 2147483647, %v134
        %v246 = vand.u32 %v245, 8388607
        %v247 = vor.u32 %v246, 8388608
        %v248 = vsub.s32 0, %v247
        %v249 = vadd.s32 %v244, 1
        %vm250 = vcmp.gt.s32.totalorder %v249, 0
        %v251 = vsel %vm250, %v249, 0
        %v252 = vshrl.u32 %v251, 5
        %v253 = vand.u32 %v251, 31
        %v254 = vsub.s32 32, %v253
        %v255 = vshrl.u32 683565275, %v254
        %v256 = vshll.u32 683565275, %v253
        %v257 = vshrl.u32 2475754826, %v254
        %v258 = vor.u32 %v256, %v257
        %v259 = vshll.u32 2475754826, %v253
        %v260 = vshrl.u32 2131351028, %v254
        %v261 = vor.u32 %v259, %v260
        %v262 = vshll.u32 2131351028, %v253
        %v263 = vshrl.u32 2102212464, %v254
        %v264 = vor.u32 %v262, %v263
        %v265 = vshll.u32 2102212464, %v253
        %v266 = vshrl.u32 920167782, %v254
        %v267 = vor.u32 %v265, %v266
        %v268 = vshll.u32 920167782, %v253
        %v269 = vshrl.u32 1326507024, %v254
        %v270 = vor.u32 %v268, %v269
        %vm271 = vcmp.lt.s32.totalorder %v252, 1
        %vm272 = vcmp.lt.s32.totalorder %v252, 2
        %vm273 = vcmp.lt.s32.totalorder %v252, 3
        %vm274 = vcmp.lt.s32.totalorder %v252, 4
        %v275 = vsel %vm271, %v255, %v258
        %v276 = vsel %vm274, %v264, 2102212464
        %v277 = vsel %vm273, %v261, %v276
        %v278 = vsel %vm272, %v275, %v277
        %v279 = vsel %vm271, %v258, %v261
        %v280 = vsel %vm274, %v267, 920167782
        %v281 = vsel %vm273, %v264, %v280
        %v282 = vsel %vm272, %v279, %v281
        %v283 = vsel %vm271, %v261, %v264
        %v284 = vsel %vm274, %v270, 1326507024
        %v285 = vsel %vm273, %v267, %v284
        %v286 = vsel %vm272, %v283, %v285
        %v287 = vshll.u32 %v247, 8
        %v288 = vmul.u32.u64.compose %v287, %v286
        %v289 = vextract.low.u32 %v288
        %v290 = vextract.high.u32 %v288
        %v291 = vmul.u32.u64.compose %v287, %v282
        %v292 = vextract.low.u32 %v291
        %v293 = vextract.high.u32 %v291
        %v294 = vmul.u32 %v287, %v278
        %v295 = vadd.s32 %v290, %v292
        %vm296 = vc.u32 %v290, %v292
        %v297 = vadd.s32 %v293, 1
        %v298 = vsel %vm296, %v297, %v293
        %v299 = vadd.s32 %v294, %v298
        %v300 = vadd.s32 %v299, 536870912
        %v301 = vshrl.u32 %v300, 30
        %v302 = vshll.u32 %v301, 30
        %v303 = vsub.s32 %v299, %v302
        %vm304 = vcmp.lt.s32.totalorder %v303, 0
        %v305 = vsub.s32 0, %v303
        %v306 = vsel %vm304, %v305, %v303
        %v307 = vclz %v306
        %v308 = vsub.s32 %v307, 2
        %vm309 = vcmp.gt.s32.totalorder 0, %v308
        %v310 = vsel %vm309, 0, %v308
        %v311 = vsub.s32 32, %v310
        %v312 = vshll.u32 %v303, %v310
        %v313 = vshrl.u32 %v295, %v311
        %v314 = vor.u32 %v312, %v313
        %v315 = vsub.s32 4294967266, %v310
        %v316 = vadd.s32 %v315, 127
        %v317 = vshll.u32 %v316, 23
        %v318 = vor.u32 4788187, %v317
        %v319 = vand.u32 2147483647, %v318
        %v321 = vcvt.s32.f32 %v314
        %v322 = vmul.f32 %v321, %v319
        %v323 = vxor.u32 %v322, 2147483648
        %v324 = vsel %vm241, %v323, %v322
        %v325 = vsub.s32 4, %v301
        %v326 = vsel %vm241, %v325, %v301
        %v327 = vsel %vm240, %v134, %v324
        %v328 = vsel %vm240, 0, %v326
        %v329 = vcosq.f32.pop %v327
        %v330 = vsinq.f32.pop %v327
        %vm331 = vweird.f32 %v134
        %v332 = vadd.s32 %v328, 3
        %v333 = vand.u32 %v332, 3
        %vm334 = vcmp.lt.s32.totalorder %v333, 2
        %vm335 = vcmp.eq.s32.totalorder %v333, 0
        %v336 = vxor.u32 %v330, 2147483648
        %v337 = vsel %vm335, %v329, %v336
        %vm338 = vcmp.eq.s32.totalorder %v333, 2
        %v339 = vxor.u32 %v329, 2147483648
        %v340 = vsel %vm338, %v339, %v330
        %v341 = vsel %vm334, %v337, %v340
        %v342 = vsel %vm331, nan, %v341
        %343 = vst [vmem:[%s107] sm:$0xff] %v238
        %344 = vst [vmem:[%s107 + $0x8] sm:$0xff] %v342
        %s345 = sand.u32 %s45, 1
        %s346 = scalar_lea.sflag [#allocation4], %s345
        %s347 = sand.u32 %s45, 1
        %s348 = smul.addr %s347, 16
        %s349 = scalar_lea.vmem [#allocation5], %s348
        // Predicated region
        $region29: #{tpu_custom_call.1} parent=23 // pred_check
          %p350 = pneg %p55
        $region30: #{tpu_custom_call.1} parent=23 // pred_check_branch
          %352 = sbr.rel (%p350) target = $region32
        $region31: #{tpu_custom_call.1} parent=23 // pred_region
          %s353 = smul.u32 2, %s16
          %s355 = ssub.s32 256, 256
          %356 = vsyncadd %s346, %s355
          %s357 = smul.addr %s353, 128
          %s358 = scalar_lea.hbm %s1, %s357
          %s359 = sshll.u32 %s349, 4
          %s360 = int_to_ptr.vmem [resolvable:$true] %s359
          %365 = dma.vmem_to_hbm [thread:$0]  %s360, 256, %s358, %s346, 128, 128, 8
        $region32: #{tpu_custom_call.1} parent=23 // pred_fallthru
          _
      $region24: #{tpu_custom_call.1} parent=5 // pred_fallthru
        _
      %p366 = scmp.le.s32.totalorder 2, %s11
      // Predicated region
      $region33: #{tpu_custom_call.1} parent=5 // pred_check
        %p367 = pneg %p366
      $region34: #{tpu_custom_call.1} parent=5 // pred_check_branch
        %369 = sbr.rel (%p367) target = $region36
      $region35: #{tpu_custom_call.1} parent=5 // pred_region
        %s370 = ssub.s32 %s11, 2
        // Predicated region
        $region37: #{tpu_custom_call.1} parent=35 // pred_check
          %p371 = pneg %p61
        $region38: #{tpu_custom_call.1} parent=35 // pred_check_branch
          %373 = sbr.rel (%p371) target = $region40
        $region39: #{tpu_custom_call.1} parent=35 // pred_region
          %s374 = sand.u32 %s46, 1
          %s375 = scalar_lea.sflag [#allocation4], %s374
          %s376 = sand.u32 %s46, 1
          %s377 = smul.addr %s376, 16
          %s378 = scalar_lea.vmem [#allocation5], %s377
          %379 = dma.done %s375, 256
        $region40: #{tpu_custom_call.1} parent=35 // pred_fallthru
          _
      $region36: #{tpu_custom_call.1} parent=5 // pred_fallthru
        _
    $region6: #{tpu_custom_call.1} parent=1 // loop_footer
      %s15 = sadd.s32 1, %s11
    $region7: #{tpu_custom_call.1} parent=1 // loop_footer_branch
      %10 = sbr.rel target = $region3
    $region8: #{tpu_custom_call.1} parent=1 // loop_exit
      _
    %380 = vsyncpa [#allocation3], 1
    %s381 = scalar_lea.sflag [#allocation3], 1
    %382 = vsyncpa %s381, 1
    %383 = vsyncpa [#allocation4], 1
    %s384 = scalar_lea.sflag [#allocation4], 1
    %385 = vsyncpa %s384, 1

</llo_original>
